<compile_context>
chip_gen: v7x
topology: tpu7x:2x2x1
jax: 0.10.0
libtpu: 0.0.40
codegen_flags: <defaults>
</compile_context>

<pallas_src>
import math
import functools

import jax
import jax.numpy as jnp
from jax.experimental import pallas as pl
from jax.experimental.pallas import tpu as pltpu


def _round_up(x, m):
    return ((x + m - 1) // m) * m


def _choose_group(d_inp, lane=128):
    """Smallest group count such that group * d_inp is a multiple of the 128-lane width."""
    return lane // math.gcd(lane, d_inp)


def _choose_col_tile(n_out, k, tile_rows, budget_bytes):
    """Largest output-column tile (multiple of 128) whose double-buffered VMEM footprint
    (input tile + weight tile + output tile) fits the budget.  Prefers exact divisors of
    n_out to avoid padding; falls back to a non-divisor cap with zero-padded columns."""
    cap = (budget_bytes // 4 - 2 * tile_rows * k) // (2 * k + 2 * tile_rows)
    cap = max(128, (cap // 128) * 128)
    if n_out <= cap:
        return n_out                      # whole weight stays resident
    best_div = 0
    for tn in range(cap, 127, -128):
        if n_out % tn == 0:
            best_div = tn
            break
    if best_div >= cap // 2:
        return best_div                   # exact divisor close to the cap: no padding
    return cap                            # pad a few zero columns instead


def make_packed_weight(weight, group):
    """Block-diagonal packed weight, built once at init.

    weight: (d_model, d_inp)  -- PyTorch nn.Linear layout.
    returns: (group*d_inp, group*d_model) with W.T repeated on the block diagonal,
    so a packed row [tok0_feats | tok1_feats | ...] @ w_packed equals
    [tok0 @ W.T | tok1 @ W.T | ...].
    """
    d_model, d_inp = weight.shape
    w_t = weight.T                                    # (d_inp, d_model)
    eye = jnp.eye(group, dtype=weight.dtype)
    w_bd = jnp.einsum("gh,km->gkhm", eye, w_t)        # value[g,k,h,m] = eye[g,h]*w_t[k,m]
    return w_bd.reshape(group * d_inp, group * d_model)


def init_time_feature_embedding(weight, *, tile_rows=512, tile_cols=None,
                                vmem_budget_bytes=8 << 20):
    """Precompute the packed weight and static tiling parameters (done once)."""
    d_model, d_inp = weight.shape
    group = _choose_group(d_inp)
    k = group * d_inp
    n_out = group * d_model
    if tile_cols is None:
        tile_cols = _choose_col_tile(n_out, k, tile_rows, vmem_budget_bytes)
    n_out_pad = _round_up(n_out, tile_cols)
    w_packed = make_packed_weight(weight, group)
    if n_out_pad != n_out:
        # Zero columns -> zero outputs, cropped in the wrapper.  Done once at init.
        w_packed = jnp.pad(w_packed, ((0, 0), (0, n_out_pad - n_out)))
    kwargs = dict(group=group, d_model=d_model, tile_rows=tile_rows, tile_cols=tile_cols)
    return w_packed, kwargs


def _packed_linear_kernel(x_ref, w_ref, o_ref):
    # One lane-dense MXU matmul per (row tile, col tile): (TM, K) @ (K, TN).
    o_ref[...] = jnp.dot(
        x_ref[...], w_ref[...], preferred_element_type=jnp.float32
    ).astype(o_ref.dtype)


def time_feature_embedding(x, w_packed, *, group, d_model, tile_rows=512, tile_cols=None):
    """x: (B, L, d_inp); w_packed: output of init_time_feature_embedding."""
    B, L, d_inp = x.shape
    K, n_out_pad = w_packed.shape
    assert K == group * d_inp, "packed weight does not match (group, d_inp)"
    n_out = group * d_model
    if tile_cols is None:
        tile_cols = n_out_pad
    assert n_out_pad % tile_cols == 0
    n_col_tiles = n_out_pad // tile_cols

    N = B * L
    n_packed = pl.cdiv(N, group)                       # packed rows (group tokens each)
    tm = min(tile_rows, _round_up(n_packed, 8))        # row tile, multiple of 8 sublanes
    n_packed_pad = _round_up(n_packed, tm)
    n_row_tiles = n_packed_pad // tm
    N_pad = n_packed_pad * group

    x2d = x.reshape(N, d_inp)
    if N_pad != N:
        x2d = jnp.pad(x2d, ((0, N_pad - N), (0, 0)))   # zero rows -> zero outputs, cropped
    x_packed = x2d.reshape(n_packed_pad, K)            # fold `group` tokens into the lanes

    out_packed = pl.pallas_call(
        _packed_linear_kernel,
        out_shape=jax.ShapeDtypeStruct((n_packed_pad, n_out_pad), x.dtype),
        grid_spec=pltpu.PrefetchScalarGridSpec(
            num_scalar_prefetch=0,
            # Rows innermost -> the weight column-tile is fetched once per column tile
            # and stays VMEM-resident across the whole row sweep.
            grid=(n_col_tiles, n_row_tiles),
            in_specs=[
                pl.BlockSpec((tm, K), lambda j, i: (i, 0)),          # row tile, pipelined
                pl.BlockSpec((K, tile_cols), lambda j, i: (0, j)),   # weight column tile
            ],
            out_specs=pl.BlockSpec((tm, tile_cols), lambda j, i: (i, j)),
        ),
        compiler_params=pltpu.CompilerParams(
            # No reduction grid axis; both axes are independent -> TC-shardable.
            dimension_semantics=("parallel", "parallel"),
        ),
    )(x_packed, w_packed)

    out = out_packed
    if n_out_pad != n_out:
        out = out[:, :n_out]
    out2d = out.reshape(N_pad, d_model)
    if N_pad != N:
        out2d = out2d[:N]
    return out2d.reshape(B, L, d_model)


if __name__ == "__main__":
    # freq='h' -> d_inp = 4 ; small d_model, batch, seq.
    d_model = 32
    d_inp = 4      # freq_map['h']
    B, L = 2, 8

    key = jax.random.PRNGKey(0)
    kx, kw = jax.random.split(key)
    x = jax.random.normal(kx, (B, L, d_inp), dtype=jnp.float32)
    # Deterministic weight, same shape as nn.Linear(d_inp, d_model).weight
    weight = jax.random.normal(kw, (d_model, d_inp), dtype=jnp.float32) * 0.1

    y_ref = jnp.einsum("bld,md->blm", x, weight)   # plain-JAX reference of the PyTorch forward

    # Path 1: default (whole packed weight resident, single column tile).
    w_packed, kwargs = init_time_feature_embedding(weight)
    fwd = jax.jit(functools.partial(time_feature_embedding, **kwargs))
    y = fwd(x, w_packed)
    jax.block_until_ready(y)
    assert y.shape == (B, L, d_model)
    assert jnp.allclose(y, y_ref, atol=1e-5, rtol=1e-5)

    # Path 2: force column tiling (exercises the 2-D grid + zero-padded weight columns),
    # the configuration used when d_model / group are large and the weight must be tiled.
    w_packed2, kwargs2 = init_time_feature_embedding(weight, tile_cols=384)
    fwd2 = jax.jit(functools.partial(time_feature_embedding, **kwargs2))
    y2 = fwd2(x, w_packed2)
    jax.block_until_ready(y2)
    assert jnp.allclose(y2, y_ref, atol=1e-5, rtol=1e-5)

    print("KERNEL_OK")
</pallas_src>

<mosaic_0001>
module attributes {stable_mosaic.version = 11 : i64} {
  func.func @_packed_linear_kernel(%arg0: i32, %arg1: i32, %arg2: memref<8x128xf32, #tpu.memory_space<vmem>>, %arg3: memref<128x1024xf32, #tpu.memory_space<vmem>>, %arg4: memref<8x1024xf32, #tpu.memory_space<vmem>>) attributes {dimension_semantics = [#tpu.dimension_semantics<parallel>, #tpu.dimension_semantics<parallel>], iteration_bounds = array<i64: 1, 1>, scalar_prefetch = 0 : i64, scratch_operands = 0 : i64, tpu.core_type = #tpu.core_type<tc>, window_params = [{transform_indices = @transform_0, window_bounds = array<i64: 8, 128>}, {transform_indices = @transform_1, window_bounds = array<i64: 128, 1024>}, {transform_indices = @transform_2, window_bounds = array<i64: 8, 1024>}]} {
    %c0 = arith.constant 0 : index
    %c0_0 = arith.constant 0 : index
    %0 = vector.load %arg2[%c0, %c0_0] : memref<8x128xf32, #tpu.memory_space<vmem>>, vector<8x128xf32>
    %c0_1 = arith.constant 0 : index
    %c0_2 = arith.constant 0 : index
    %1 = vector.load %arg3[%c0_1, %c0_2] : memref<128x1024xf32, #tpu.memory_space<vmem>>, vector<128x1024xf32>
    %cst = arith.constant dense<0.000000e+00> : vector<8x1024xf32>
    %2 = tpu.matmul %0, %1, %cst {dimension_numbers = #tpu.dot_dimension_numbers<[1], [0], [0], [1], [0, 0, 1, 1], [], []>} : vector<8x128xf32>, vector<128x1024xf32>, vector<8x1024xf32> -> vector<8x1024xf32>
    %c0_3 = arith.constant 0 : index
    %c0_4 = arith.constant 0 : index
    %3 = vector.load %arg4[%c0_3, %c0_4] : memref<8x1024xf32, #tpu.memory_space<vmem>>, vector<8x1024xf32>
    tpu.vector_store %arg4[%c0_3, %c0_4], %2 {strides = array<i32>} : memref<8x1024xf32, #tpu.memory_space<vmem>>, vector<8x1024xf32>,
    return
  }
  func.func @transform_0(%arg0: i32, %arg1: i32) -> (i32, i32) {
    %c0_i32 = arith.constant 0 : i32
    %c0_i32_0 = arith.constant 0 : i32
    return %arg1, %c0_i32 : i32, i32
  }
  func.func @transform_1(%arg0: i32, %arg1: i32) -> (i32, i32) {
    %c0_i32 = arith.constant 0 : i32
    %c0_i32_0 = arith.constant 0 : i32
    return %c0_i32, %arg0 : i32, i32
  }
  func.func @transform_2(%arg0: i32, %arg1: i32) -> (i32, i32) {
    %c0_i32 = arith.constant 0 : i32
    return %arg1, %arg0 : i32, i32
  }
}

</mosaic_0001>

<llo_original>
// kernel: time_feature_embedding.1
$region0: #{time_feature_embedding.1}
  #allocation0 [shape = 'u32[]', space=smem, size = 0x4, offset = 0x4, fixed_abs, tag = 'smem constant byte address 0x4 - core index']
  #allocation1 [shape = 'u32[144,128]{1,0:T(1,128)}', space=vmem, size = 0x12000, scoped, tag = 'internal scratch']
  %s0 = inlined_call_operand.vmem [shape: f32[8,128], index: 0, kind: input, shape index: {}]
  %s1 = inlined_call_operand.hbm [shape: f32[128,1024], index: 1, kind: input, shape index: {}]
  %s2 = inlined_call_operand.vmem [shape: f32[8,1024], index: 2, kind: output, shape index: {}]
  %s3 = sld [smem:[#allocation0]]
  $region22: #{time_feature_embedding.1} parent=0
    _
  %s5 = ssub.s32 1, %s3
  %s6 = scalar_select 0, %s5, %s3
  $region1: #{time_feature_embedding.1} parent=0
    #allocation2 [shape = 'u8[524288]{0}', space=vmem, size = 0x80000, scoped, tag = 'input window, operand 1, single buffered']
    #allocation3 [shape = 's32[1]{0}', space=sflag, size = 0x4, scoped, tag = 'scoped memory for time_feature_embedding.1']
    %7 = vsyncpa [#allocation3], 0
    // Predicated region
    $region2: #{time_feature_embedding.1} parent=1 // pred_check
      _
    $region3: #{time_feature_embedding.1} parent=1 // pred_check_branch
      %9 = sbr.rel (0) target = $region5
    $region4: #{time_feature_embedding.1} parent=1 // pred_region
      _
    $region5: #{time_feature_embedding.1} parent=1 // pred_fallthru
      _
    // Predicated region
    $region6: #{time_feature_embedding.1} parent=1 // pred_check
      _
    $region7: #{time_feature_embedding.1} parent=1 // pred_check_branch
      %11 = sbr.rel (0) target = $region9
    $region8: #{time_feature_embedding.1} parent=1 // pred_region
      %s13 = ssub.s32 16384, 16384
      %14 = vsyncadd [#allocation3], %s13
      %s15 = sshll.u32 [#allocation2], 4
      %s16 = int_to_ptr.vmem [resolvable:$true] %s15
      %21 = dma.hbm_to_vmem [thread:$0]  %s1, 16384, %s16, [#allocation3], 1024, 1024, 64
    $region9: #{time_feature_embedding.1} parent=1 // pred_fallthru
      _
    // Predicated region
    $region10: #{time_feature_embedding.1} parent=1 // pred_check
      _
    $region11: #{time_feature_embedding.1} parent=1 // pred_check_branch
      %23 = sbr.rel (0) target = $region13
    $region12: #{time_feature_embedding.1} parent=1 // pred_region
      %24 = dma.done [#allocation3], 16384
    $region13: #{time_feature_embedding.1} parent=1 // pred_fallthru
      _
    %v25 = vld [vmem:[%s0] sm:$0xff]
    %v26 = vld [vmem:[#allocation2] sm:$0xff]
    %v27 = vld [vmem:[#allocation2 + $0x8] sm:$0xff]
    %v28 = vld [vmem:[#allocation2 + $0x10] sm:$0xff]
    %v29 = vld [vmem:[#allocation2 + $0x18] sm:$0xff]
    %v30 = vld [vmem:[#allocation2 + $0x20] sm:$0xff]
    %v31 = vld [vmem:[#allocation2 + $0x28] sm:$0xff]
    %v32 = vld [vmem:[#allocation2 + $0x30] sm:$0xff]
    %v33 = vld [vmem:[#allocation2 + $0x38] sm:$0xff]
    %v34 = vld [vmem:[#allocation2 + $0x40] sm:$0xff]
    %v35 = vld [vmem:[#allocation2 + $0x48] sm:$0xff]
    %v36 = vld [vmem:[#allocation2 + $0x50] sm:$0xff]
    %v37 = vld [vmem:[#allocation2 + $0x58] sm:$0xff]
    %v38 = vld [vmem:[#allocation2 + $0x60] sm:$0xff]
    %v39 = vld [vmem:[#allocation2 + $0x68] sm:$0xff]
    %v40 = vld [vmem:[#allocation2 + $0x70] sm:$0xff]
    %v41 = vld [vmem:[#allocation2 + $0x78] sm:$0xff]
    %v42 = vld [vmem:[#allocation2 + $0x80] sm:$0xff]
    %v43 = vld [vmem:[#allocation2 + $0x88] sm:$0xff]
    %v44 = vld [vmem:[#allocation2 + $0x90] sm:$0xff]
    %v45 = vld [vmem:[#allocation2 + $0x98] sm:$0xff]
    %v46 = vld [vmem:[#allocation2 + $0xa0] sm:$0xff]
    %v47 = vld [vmem:[#allocation2 + $0xa8] sm:$0xff]
    %v48 = vld [vmem:[#allocation2 + $0xb0] sm:$0xff]
    %v49 = vld [vmem:[#allocation2 + $0xb8] sm:$0xff]
    %v50 = vld [vmem:[#allocation2 + $0xc0] sm:$0xff]
    %v51 = vld [vmem:[#allocation2 + $0xc8] sm:$0xff]
    %v52 = vld [vmem:[#allocation2 + $0xd0] sm:$0xff]
    %v53 = vld [vmem:[#allocation2 + $0xd8] sm:$0xff]
    %v54 = vld [vmem:[#allocation2 + $0xe0] sm:$0xff]
    %v55 = vld [vmem:[#allocation2 + $0xe8] sm:$0xff]
    %v56 = vld [vmem:[#allocation2 + $0xf0] sm:$0xff]
    %v57 = vld [vmem:[#allocation2 + $0xf8] sm:$0xff]
    %v58 = vld [vmem:[#allocation2 + $0x100] sm:$0xff]
    %v59 = vld [vmem:[#allocation2 + $0x108] sm:$0xff]
    %v60 = vld [vmem:[#allocation2 + $0x110] sm:$0xff]
    %v61 = vld [vmem:[#allocation2 + $0x118] sm:$0xff]
    %v62 = vld [vmem:[#allocation2 + $0x120] sm:$0xff]
    %v63 = vld [vmem:[#allocation2 + $0x128] sm:$0xff]
    %v64 = vld [vmem:[#allocation2 + $0x130] sm:$0xff]
    %v65 = vld [vmem:[#allocation2 + $0x138] sm:$0xff]
    %v66 = vld [vmem:[#allocation2 + $0x140] sm:$0xff]
    %v67 = vld [vmem:[#allocation2 + $0x148] sm:$0xff]
    %v68 = vld [vmem:[#allocation2 + $0x150] sm:$0xff]
    %v69 = vld [vmem:[#allocation2 + $0x158] sm:$0xff]
    %v70 = vld [vmem:[#allocation2 + $0x160] sm:$0xff]
    %v71 = vld [vmem:[#allocation2 + $0x168] sm:$0xff]
    %v72 = vld [vmem:[#allocation2 + $0x170] sm:$0xff]
    %v73 = vld [vmem:[#allocation2 + $0x178] sm:$0xff]
    %v74 = vld [vmem:[#allocation2 + $0x180] sm:$0xff]
    %v75 = vld [vmem:[#allocation2 + $0x188] sm:$0xff]
    %v76 = vld [vmem:[#allocation2 + $0x190] sm:$0xff]
    %v77 = vld [vmem:[#allocation2 + $0x198] sm:$0xff]
    %v78 = vld [vmem:[#allocation2 + $0x1a0] sm:$0xff]
    %v79 = vld [vmem:[#allocation2 + $0x1a8] sm:$0xff]
    %v80 = vld [vmem:[#allocation2 + $0x1b0] sm:$0xff]
    %v81 = vld [vmem:[#allocation2 + $0x1b8] sm:$0xff]
    %v82 = vld [vmem:[#allocation2 + $0x1c0] sm:$0xff]
    %v83 = vld [vmem:[#allocation2 + $0x1c8] sm:$0xff]
    %v84 = vld [vmem:[#allocation2 + $0x1d0] sm:$0xff]
    %v85 = vld [vmem:[#allocation2 + $0x1d8] sm:$0xff]
    %v86 = vld [vmem:[#allocation2 + $0x1e0] sm:$0xff]
    %v87 = vld [vmem:[#allocation2 + $0x1e8] sm:$0xff]
    %v88 = vld [vmem:[#allocation2 + $0x1f0] sm:$0xff]
    %v89 = vld [vmem:[#allocation2 + $0x1f8] sm:$0xff]
    %v90 = vld [vmem:[#allocation2 + $0x200] sm:$0xff]
    %v91 = vld [vmem:[#allocation2 + $0x208] sm:$0xff]
    %v92 = vld [vmem:[#allocation2 + $0x210] sm:$0xff]
    %v93 = vld [vmem:[#allocation2 + $0x218] sm:$0xff]
    %v94 = vld [vmem:[#allocation2 + $0x220] sm:$0xff]
    %v95 = vld [vmem:[#allocation2 + $0x228] sm:$0xff]
    %v96 = vld [vmem:[#allocation2 + $0x230] sm:$0xff]
    %v97 = vld [vmem:[#allocation2 + $0x238] sm:$0xff]
    %v98 = vld [vmem:[#allocation2 + $0x240] sm:$0xff]
    %v99 = vld [vmem:[#allocation2 + $0x248] sm:$0xff]
    %v100 = vld [vmem:[#allocation2 + $0x250] sm:$0xff]
    %v101 = vld [vmem:[#allocation2 + $0x258] sm:$0xff]
    %v102 = vld [vmem:[#allocation2 + $0x260] sm:$0xff]
    %v103 = vld [vmem:[#allocation2 + $0x268] sm:$0xff]
    %v104 = vld [vmem:[#allocation2 + $0x270] sm:$0xff]
    %v105 = vld [vmem:[#allocation2 + $0x278] sm:$0xff]
    %v106 = vld [vmem:[#allocation2 + $0x280] sm:$0xff]
    %v107 = vld [vmem:[#allocation2 + $0x288] sm:$0xff]
    %v108 = vld [vmem:[#allocation2 + $0x290] sm:$0xff]
    %v109 = vld [vmem:[#allocation2 + $0x298] sm:$0xff]
    %v110 = vld [vmem:[#allocation2 + $0x2a0] sm:$0xff]
    %v111 = vld [vmem:[#allocation2 + $0x2a8] sm:$0xff]
    %v112 = vld [vmem:[#allocation2 + $0x2b0] sm:$0xff]
    %v113 = vld [vmem:[#allocation2 + $0x2b8] sm:$0xff]
    %v114 = vld [vmem:[#allocation2 + $0x2c0] sm:$0xff]
    %v115 = vld [vmem:[#allocation2 + $0x2c8] sm:$0xff]
    %v116 = vld [vmem:[#allocation2 + $0x2d0] sm:$0xff]
    %v117 = vld [vmem:[#allocation2 + $0x2d8] sm:$0xff]
    %v118 = vld [vmem:[#allocation2 + $0x2e0] sm:$0xff]
    %v119 = vld [vmem:[#allocation2 + $0x2e8] sm:$0xff]
    %v120 = vld [vmem:[#allocation2 + $0x2f0] sm:$0xff]
    %v121 = vld [vmem:[#allocation2 + $0x2f8] sm:$0xff]
    %v122 = vld [vmem:[#allocation2 + $0x300] sm:$0xff]
    %v123 = vld [vmem:[#allocation2 + $0x308] sm:$0xff]
    %v124 = vld [vmem:[#allocation2 + $0x310] sm:$0xff]
    %v125 = vld [vmem:[#allocation2 + $0x318] sm:$0xff]
    %v126 = vld [vmem:[#allocation2 + $0x320] sm:$0xff]
    %v127 = vld [vmem:[#allocation2 + $0x328] sm:$0xff]
    %v128 = vld [vmem:[#allocation2 + $0x330] sm:$0xff]
    %v129 = vld [vmem:[#allocation2 + $0x338] sm:$0xff]
    %v130 = vld [vmem:[#allocation2 + $0x340] sm:$0xff]
    %v131 = vld [vmem:[#allocation2 + $0x348] sm:$0xff]
    %v132 = vld [vmem:[#allocation2 + $0x350] sm:$0xff]
    %v133 = vld [vmem:[#allocation2 + $0x358] sm:$0xff]
    %v134 = vld [vmem:[#allocation2 + $0x360] sm:$0xff]
    %v135 = vld [vmem:[#allocation2 + $0x368] sm:$0xff]
    %v136 = vld [vmem:[#allocation2 + $0x370] sm:$0xff]
    %v137 = vld [vmem:[#allocation2 + $0x378] sm:$0xff]
    %v138 = vld [vmem:[#allocation2 + $0x380] sm:$0xff]
    %v139 = vld [vmem:[#allocation2 + $0x388] sm:$0xff]
    %v140 = vld [vmem:[#allocation2 + $0x390] sm:$0xff]
    %v141 = vld [vmem:[#allocation2 + $0x398] sm:$0xff]
    %v142 = vld [vmem:[#allocation2 + $0x3a0] sm:$0xff]
    %v143 = vld [vmem:[#allocation2 + $0x3a8] sm:$0xff]
    %v144 = vld [vmem:[#allocation2 + $0x3b0] sm:$0xff]
    %v145 = vld [vmem:[#allocation2 + $0x3b8] sm:$0xff]
    %v146 = vld [vmem:[#allocation2 + $0x3c0] sm:$0xff]
    %v147 = vld [vmem:[#allocation2 + $0x3c8] sm:$0xff]
    %v148 = vld [vmem:[#allocation2 + $0x3d0] sm:$0xff]
    %v149 = vld [vmem:[#allocation2 + $0x3d8] sm:$0xff]
    %v150 = vld [vmem:[#allocation2 + $0x3e0] sm:$0xff]
    %v151 = vld [vmem:[#allocation2 + $0x3e8] sm:$0xff]
    %v152 = vld [vmem:[#allocation2 + $0x3f0] sm:$0xff]
    %v153 = vld [vmem:[#allocation2 + $0x3f8] sm:$0xff]
    %154 = vmatprep.subr.mxu0 %v27
    %155 = vmatpush1.msra.mxu0 %v26
    %156 = vmatprep.subr.mxu0 %v35
    %157 = vmatpush1.msra.mxu0 %v34
    %158 = vmatprep.subr.mxu0 %v43
    %159 = vmatpush1.msra.mxu0 %v42
    %160 = vmatprep.subr.mxu0 %v51
    %161 = vmatpush1.msra.mxu0 %v50
    %162 = vmatprep.subr.mxu0 %v59
    %163 = vmatpush1.msra.mxu0 %v58
    %164 = vmatprep.subr.mxu0 %v67
    %165 = vmatpush1.msra.mxu0 %v66
    %166 = vmatprep.subr.mxu0 %v75
    %167 = vmatpush1.msra.mxu0 %v74
    %168 = vmatprep.subr.mxu0 %v83
    %169 = vmatpush1.msra.mxu0 %v82
    %170 = vmatprep.subr.mxu0 %v91
    %171 = vmatpush1.msra.mxu0 %v90
    %172 = vmatprep.subr.mxu0 %v99
    %173 = vmatpush1.msra.mxu0 %v98
    %174 = vmatprep.subr.mxu0 %v107
    %175 = vmatpush1.msra.mxu0 %v106
    %176 = vmatprep.subr.mxu0 %v115
    %177 = vmatpush1.msra.mxu0 %v114
    %178 = vmatprep.subr.mxu0 %v123
    %179 = vmatpush1.msra.mxu0 %v122
    %180 = vmatprep.subr.mxu0 %v131
    %181 = vmatpush1.msra.mxu0 %v130
    %182 = vmatprep.subr.mxu0 %v139
    %183 = vmatpush1.msra.mxu0 %v138
    %184 = vmatprep.subr.mxu0 %v147
    %185 = vmatpush1.msra.mxu0 %v146
    %186 = vmatprep.subr.mxu0 0.0
    %187 = vmatpush1.msra.mxu0 0.0
    %188 = vmatprep.subr.mxu0 0.0
    %189 = vmatpush1.msra.mxu0 0.0
    %190 = vmatprep.subr.mxu0 0.0
    %191 = vmatpush1.msra.mxu0 0.0
    %192 = vmatprep.subr.mxu0 0.0
    %193 = vmatpush1.msra.mxu0 0.0
    %194 = vmatprep.subr.mxu0 0.0
    %195 = vmatpush1.msra.mxu0 0.0
    %196 = vmatprep.subr.mxu0 0.0
    %197 = vmatpush1.msra.mxu0 0.0
    %198 = vmatprep.subr.mxu0 0.0
    %199 = vmatpush1.msra.mxu0 0.0
    %200 = vmatprep.subr.mxu0 0.0
    %201 = vmatpush1.msra.mxu0 0.0
    %202 = vmatprep.subr.mxu0 0.0
    %203 = vmatpush1.msra.mxu0 0.0
    %204 = vmatprep.subr.mxu0 0.0
    %205 = vmatpush1.msra.mxu0 0.0
    %206 = vmatprep.subr.mxu0 0.0
    %207 = vmatpush1.msra.mxu0 0.0
    %208 = vmatprep.subr.mxu0 0.0
    %209 = vmatpush1.msra.mxu0 0.0
    %210 = vmatprep.subr.mxu0 0.0
    %211 = vmatpush1.msra.mxu0 0.0
    %212 = vmatprep.subr.mxu0 0.0
    %213 = vmatpush1.msra.mxu0 0.0
    %214 = vmatprep.subr.mxu0 0.0
    %215 = vmatpush1.msra.mxu0 0.0
    %216 = vmatprep.subr.mxu0 0.0
    %217 = vmatpush1.msra.mxu0 0.0
    %218 = vmatprep.mubr.f32.mxu0 0.0
    %219 = vmatmul.mubr.f32.gmra.mrb[0].mxu0 %v25
    %v220 = vpop.f32.mrb[0].mxu0
    %v221 = vadd.f32 0.0, %v220
    %v222 = vpop.f32.mrb[0].mxu0
    %v223 = vadd.f32 0.0, %v222
    %224 = vdwg.mxu0
    %225 = vmatprep.subr.mxu0 %v29
    %226 = vmatpush1.msra.mxu0 %v28
    %227 = vmatprep.subr.mxu0 %v37
    %228 = vmatpush1.msra.mxu0 %v36
    %229 = vmatprep.subr.mxu0 %v45
    %230 = vmatpush1.msra.mxu0 %v44
    %231 = vmatprep.subr.mxu0 %v53
    %232 = vmatpush1.msra.mxu0 %v52
    %233 = vmatprep.subr.mxu0 %v61
    %234 = vmatpush1.msra.mxu0 %v60
    %235 = vmatprep.subr.mxu0 %v69
    %236 = vmatpush1.msra.mxu0 %v68
    %237 = vmatprep.subr.mxu0 %v77
    %238 = vmatpush1.msra.mxu0 %v76
    %239 = vmatprep.subr.mxu0 %v85
    %240 = vmatpush1.msra.mxu0 %v84
    %241 = vmatprep.subr.mxu0 %v93
    %242 = vmatpush1.msra.mxu0 %v92
    %243 = vmatprep.subr.mxu0 %v101
    %244 = vmatpush1.msra.mxu0 %v100
    %245 = vmatprep.subr.mxu0 %v109
    %246 = vmatpush1.msra.mxu0 %v108
    %247 = vmatprep.subr.mxu0 %v117
    %248 = vmatpush1.msra.mxu0 %v116
    %249 = vmatprep.subr.mxu0 %v125
    %250 = vmatpush1.msra.mxu0 %v124
    %251 = vmatprep.subr.mxu0 %v133
    %252 = vmatpush1.msra.mxu0 %v132
    %253 = vmatprep.subr.mxu0 %v141
    %254 = vmatpush1.msra.mxu0 %v140
    %255 = vmatprep.subr.mxu0 %v149
    %256 = vmatpush1.msra.mxu0 %v148
    %257 = vmatprep.subr.mxu0 0.0
    %258 = vmatpush1.msra.mxu0 0.0
    %259 = vmatprep.subr.mxu0 0.0
    %260 = vmatpush1.msra.mxu0 0.0
    %261 = vmatprep.subr.mxu0 0.0
    %262 = vmatpush1.msra.mxu0 0.0
    %263 = vmatprep.subr.mxu0 0.0
    %264 = vmatpush1.msra.mxu0 0.0
    %265 = vmatprep.subr.mxu0 0.0
    %266 = vmatpush1.msra.mxu0 0.0
    %267 = vmatprep.subr.mxu0 0.0
    %268 = vmatpush1.msra.mxu0 0.0
    %269 = vmatprep.subr.mxu0 0.0
    %270 = vmatpush1.msra.mxu0 0.0
    %271 = vmatprep.subr.mxu0 0.0
    %272 = vmatpush1.msra.mxu0 0.0
    %273 = vmatprep.subr.mxu0 0.0
    %274 = vmatpush1.msra.mxu0 0.0
    %275 = vmatprep.subr.mxu0 0.0
    %276 = vmatpush1.msra.mxu0 0.0
    %277 = vmatprep.subr.mxu0 0.0
    %278 = vmatpush1.msra.mxu0 0.0
    %279 = vmatprep.subr.mxu0 0.0
    %280 = vmatpush1.msra.mxu0 0.0
    %281 = vmatprep.subr.mxu0 0.0
    %282 = vmatpush1.msra.mxu0 0.0
    %283 = vmatprep.subr.mxu0 0.0
    %284 = vmatpush1.msra.mxu0 0.0
    %285 = vmatprep.subr.mxu0 0.0
    %286 = vmatpush1.msra.mxu0 0.0
    %287 = vmatprep.subr.mxu0 0.0
    %288 = vmatpush1.msra.mxu0 0.0
    %289 = vmatprep.mubr.f32.mxu0 0.0
    %290 = vmatmul.mubr.f32.gmra.mrb[0].mxu0 %v25
    %v291 = vpop.f32.mrb[0].mxu0
    %v292 = vadd.f32 0.0, %v291
    %v293 = vpop.f32.mrb[0].mxu0
    %v294 = vadd.f32 0.0, %v293
    %295 = vdwg.mxu0
    %296 = vmatprep.subr.mxu0 %v31
    %297 = vmatpush1.msra.mxu0 %v30
    %298 = vmatprep.subr.mxu0 %v39
    %299 = vmatpush1.msra.mxu0 %v38
    %300 = vmatprep.subr.mxu0 %v47
    %301 = vmatpush1.msra.mxu0 %v46
    %302 = vmatprep.subr.mxu0 %v55
    %303 = vmatpush1.msra.mxu0 %v54
    %304 = vmatprep.subr.mxu0 %v63
    %305 = vmatpush1.msra.mxu0 %v62
    %306 = vmatprep.subr.mxu0 %v71
    %307 = vmatpush1.msra.mxu0 %v70
    %308 = vmatprep.subr.mxu0 %v79
    %309 = vmatpush1.msra.mxu0 %v78
    %310 = vmatprep.subr.mxu0 %v87
    %311 = vmatpush1.msra.mxu0 %v86
    %312 = vmatprep.subr.mxu0 %v95
    %313 = vmatpush1.msra.mxu0 %v94
    %314 = vmatprep.subr.mxu0 %v103
    %315 = vmatpush1.msra.mxu0 %v102
    %316 = vmatprep.subr.mxu0 %v111
    %317 = vmatpush1.msra.mxu0 %v110
    %318 = vmatprep.subr.mxu0 %v119
    %319 = vmatpush1.msra.mxu0 %v118
    %320 = vmatprep.subr.mxu0 %v127
    %321 = vmatpush1.msra.mxu0 %v126
    %322 = vmatprep.subr.mxu0 %v135
    %323 = vmatpush1.msra.mxu0 %v134
    %324 = vmatprep.subr.mxu0 %v143
    %325 = vmatpush1.msra.mxu0 %v142
    %326 = vmatprep.subr.mxu0 %v151
    %327 = vmatpush1.msra.mxu0 %v150
    %328 = vmatprep.subr.mxu0 0.0
    %329 = vmatpush1.msra.mxu0 0.0
    %330 = vmatprep.subr.mxu0 0.0
    %331 = vmatpush1.msra.mxu0 0.0
    %332 = vmatprep.subr.mxu0 0.0
    %333 = vmatpush1.msra.mxu0 0.0
    %334 = vmatprep.subr.mxu0 0.0
    %335 = vmatpush1.msra.mxu0 0.0
    %336 = vmatprep.subr.mxu0 0.0
    %337 = vmatpush1.msra.mxu0 0.0
    %338 = vmatprep.subr.mxu0 0.0
    %339 = vmatpush1.msra.mxu0 0.0
    %340 = vmatprep.subr.mxu0 0.0
    %341 = vmatpush1.msra.mxu0 0.0
    %342 = vmatprep.subr.mxu0 0.0
    %343 = vmatpush1.msra.mxu0 0.0
    %344 = vmatprep.subr.mxu0 0.0
    %345 = vmatpush1.msra.mxu0 0.0
    %346 = vmatprep.subr.mxu0 0.0
    %347 = vmatpush1.msra.mxu0 0.0
    %348 = vmatprep.subr.mxu0 0.0
    %349 = vmatpush1.msra.mxu0 0.0
    %350 = vmatprep.subr.mxu0 0.0
    %351 = vmatpush1.msra.mxu0 0.0
    %352 = vmatprep.subr.mxu0 0.0
    %353 = vmatpush1.msra.mxu0 0.0
    %354 = vmatprep.subr.mxu0 0.0
    %355 = vmatpush1.msra.mxu0 0.0
    %356 = vmatprep.subr.mxu0 0.0
    %357 = vmatpush1.msra.mxu0 0.0
    %358 = vmatprep.subr.mxu0 0.0
    %359 = vmatpush1.msra.mxu0 0.0
    %360 = vmatprep.mubr.f32.mxu0 0.0
    %361 = vmatmul.mubr.f32.gmra.mrb[0].mxu0 %v25
    %v362 = vpop.f32.mrb[0].mxu0
    %v363 = vadd.f32 0.0, %v362
    %v364 = vpop.f32.mrb[0].mxu0
    %v365 = vadd.f32 0.0, %v364
    %366 = vdwg.mxu0
    %367 = vmatprep.subr.mxu0 %v33
    %368 = vmatpush1.msra.mxu0 %v32
    %369 = vmatprep.subr.mxu0 %v41
    %370 = vmatpush1.msra.mxu0 %v40
    %371 = vmatprep.subr.mxu0 %v49
    %372 = vmatpush1.msra.mxu0 %v48
    %373 = vmatprep.subr.mxu0 %v57
    %374 = vmatpush1.msra.mxu0 %v56
    %375 = vmatprep.subr.mxu0 %v65
    %376 = vmatpush1.msra.mxu0 %v64
    %377 = vmatprep.subr.mxu0 %v73
    %378 = vmatpush1.msra.mxu0 %v72
    %379 = vmatprep.subr.mxu0 %v81
    %380 = vmatpush1.msra.mxu0 %v80
    %381 = vmatprep.subr.mxu0 %v89
    %382 = vmatpush1.msra.mxu0 %v88
    %383 = vmatprep.subr.mxu0 %v97
    %384 = vmatpush1.msra.mxu0 %v96
    %385 = vmatprep.subr.mxu0 %v105
    %386 = vmatpush1.msra.mxu0 %v104
    %387 = vmatprep.subr.mxu0 %v113
    %388 = vmatpush1.msra.mxu0 %v112
    %389 = vmatprep.subr.mxu0 %v121
    %390 = vmatpush1.msra.mxu0 %v120
    %391 = vmatprep.subr.mxu0 %v129
    %392 = vmatpush1.msra.mxu0 %v128
    %393 = vmatprep.subr.mxu0 %v137
    %394 = vmatpush1.msra.mxu0 %v136
    %395 = vmatprep.subr.mxu0 %v145
    %396 = vmatpush1.msra.mxu0 %v144
    %397 = vmatprep.subr.mxu0 %v153
    %398 = vmatpush1.msra.mxu0 %v152
    %399 = vmatprep.subr.mxu0 0.0
    %400 = vmatpush1.msra.mxu0 0.0
    %401 = vmatprep.subr.mxu0 0.0
    %402 = vmatpush1.msra.mxu0 0.0
    %403 = vmatprep.subr.mxu0 0.0
    %404 = vmatpush1.msra.mxu0 0.0
    %405 = vmatprep.subr.mxu0 0.0
    %406 = vmatpush1.msra.mxu0 0.0
    %407 = vmatprep.subr.mxu0 0.0
    %408 = vmatpush1.msra.mxu0 0.0
    %409 = vmatprep.subr.mxu0 0.0
    %410 = vmatpush1.msra.mxu0 0.0
    %411 = vmatprep.subr.mxu0 0.0
    %412 = vmatpush1.msra.mxu0 0.0
    %413 = vmatprep.subr.mxu0 0.0
    %414 = vmatpush1.msra.mxu0 0.0
    %415 = vmatprep.subr.mxu0 0.0
    %416 = vmatpush1.msra.mxu0 0.0
    %417 = vmatprep.subr.mxu0 0.0
    %418 = vmatpush1.msra.mxu0 0.0
    %419 = vmatprep.subr.mxu0 0.0
    %420 = vmatpush1.msra.mxu0 0.0
    %421 = vmatprep.subr.mxu0 0.0
    %422 = vmatpush1.msra.mxu0 0.0
    %423 = vmatprep.subr.mxu0 0.0
    %424 = vmatpush1.msra.mxu0 0.0
    %425 = vmatprep.subr.mxu0 0.0
    %426 = vmatpush1.msra.mxu0 0.0
    %427 = vmatprep.subr.mxu0 0.0
    %428 = vmatpush1.msra.mxu0 0.0
    %429 = vmatprep.subr.mxu0 0.0
    %430 = vmatpush1.msra.mxu0 0.0
    %431 = vmatprep.mubr.f32.mxu0 0.0
    %432 = vmatmul.mubr.f32.gmra.mrb[0].mxu0 %v25
    %v433 = vpop.f32.mrb[0].mxu0
    %v434 = vadd.f32 0.0, %v433
    %v435 = vpop.f32.mrb[0].mxu0
    %v436 = vadd.f32 0.0, %v435
    %437 = vdwg.mxu0
    %438 = vst [vmem:[%s2] sm:$0xff] %v221
    %439 = vst [vmem:[%s2 + $0x8] sm:$0xff] %v223
    %440 = vst [vmem:[%s2 + $0x10] sm:$0xff] %v292
    %441 = vst [vmem:[%s2 + $0x18] sm:$0xff] %v294
    %442 = vst [vmem:[%s2 + $0x20] sm:$0xff] %v363
    %443 = vst [vmem:[%s2 + $0x28] sm:$0xff] %v365
    %444 = vst [vmem:[%s2 + $0x30] sm:$0xff] %v434
    %445 = vst [vmem:[%s2 + $0x38] sm:$0xff] %v436
    // Predicated region
    $region14: #{time_feature_embedding.1} parent=1 // pred_check
      _
    $region15: #{time_feature_embedding.1} parent=1 // pred_check_branch
      %447 = sbr.rel (0) target = $region17
    $region16: #{time_feature_embedding.1} parent=1 // pred_region
      _
    $region17: #{time_feature_embedding.1} parent=1 // pred_fallthru
      _
    // Predicated region
    $region18: #{time_feature_embedding.1} parent=1 // pred_check
      _
    $region19: #{time_feature_embedding.1} parent=1 // pred_check_branch
      %449 = sbr.rel (0) target = $region21
    $region20: #{time_feature_embedding.1} parent=1 // pred_region
      _
    $region21: #{time_feature_embedding.1} parent=1 // pred_fallthru
      _
    %450 = vsyncpa [#allocation3], 1

</llo_original>
